<compile_context>
chip_gen: v5e
topology: v5e:2x2
jax: 0.10.0
libtpu: 0.0.40
codegen_flags: <defaults>
</compile_context>

<pallas_src>
import functools

import jax
import jax.numpy as jnp
import numpy as np
from jax import lax
from jax.experimental import pallas as pl
from jax.experimental.pallas import tpu as pltpu


def _dsconv_kernel(x_ref, dw_w_ref, pw_w_ref, b_ref, o_ref, *, k: int,
                   mxu_dtype):
    # x_ref:    (B_blk, C_in, L)   activation block (native layout, native dtype)
    # dw_w_ref: (k, C_in, 1)       depthwise weights, one (C_in, 1) tap each
    # pw_w_ref: (C_out, C_in)      pointwise 1x1 weights
    # b_ref:    (C_out, 1) f32     fused bias  = pw_w @ dw_b + pw_b
    # o_ref:    (B_blk, C_out, L)
    pad = k // 2
    b_blk, _, length = x_ref.shape

    # Lane position inside the sequence (for the conv zero-padding halo mask).
    pos = lax.broadcasted_iota(jnp.int32, (1, length), 1)

    # Resident small operands, loaded once per grid step.
    taps = [dw_w_ref[t].astype(jnp.float32) for t in range(k)]   # each (C_in, 1)
    w = pw_w_ref[...].astype(mxu_dtype)                          # (C_out, C_in)
    bias = b_ref[...]                                            # (C_out, 1) f32

    for b in range(b_blk):                       # static, small unroll
        xb = x_ref[b].astype(jnp.float32)        # (C_in, L)

        # --- depthwise conv: unrolled k-tap MAC (VPU), shifts on the XLU ---
        acc = taps[pad] * xb                     # center tap: no shift, no mask
        for t in range(k):
            if t == pad:
                continue
            delta = t - pad                      # tap offset in [-pad, pad]
            # rolled[p] == xb[(p + delta) % L]; lanes whose source falls
            # outside [0, L) are exactly the conv's zero padding -> mask them.
            rolled = pltpu.roll(xb, shift=(-delta) % length, axis=1)
            if delta > 0:
                mask = pos < (length - delta)
            else:
                mask = pos >= (-delta)
            acc = acc + taps[t] * jnp.where(mask, rolled, 0.0)

        # --- pointwise 1x1 conv: MXU matmul + fused bias epilogue ---
        out_b = jnp.dot(w, acc.astype(mxu_dtype),
                        preferred_element_type=jnp.float32)      # (C_out, L)
        o_ref[b] = (out_b + bias).astype(o_ref.dtype)


def _vmem_capacity_bytes() -> int:
    """Physical VMEM per TensorCore (64 MiB on v7x, 128 MiB on v5e/v6e)."""
    try:
        cap = getattr(pltpu.get_tpu_info(), "vmem_capacity_bytes", None)
        if cap:
            return int(cap)
    except Exception:
        pass
    return 64 * 1024 * 1024   # conservative default (v7x per-TC)


def depthwise_separable_conv(x, dw_w, dw_b, pw_w, pw_b, *, k: int):
    """Forward of DepthwiseSeparableConv (dim=1).

    x:    (N, C_in, L)
    dw_w: (C_in, 1, k)     depthwise Conv1d weight (groups=C_in, padding=k//2)
    dw_b: (C_in,)          depthwise bias
    pw_w: (C_out, C_in, 1) pointwise 1x1 Conv1d weight
    pw_b: (C_out,)         pointwise bias
    Returns (N, C_out, L) with x's dtype.
    """
    if k % 2 != 1:
        raise ValueError("kernel size k must be odd for PyTorch padding=k//2 "
                         "'same'-length semantics")
    n, c_in, length = x.shape
    c_out = pw_w.shape[0]

    # Tiny weight relayouts only (no activation relayout).
    dw_wk = jnp.transpose(dw_w.reshape(c_in, k), (1, 0))[:, :, None]   # (k, C_in, 1)
    pw_w2 = pw_w.reshape(c_out, c_in)                                  # (C_out, C_in)
    # Fold the depthwise bias through the (linear) pointwise conv:
    #   pw_w @ (y + dw_b) + pw_b == pw_w @ y + (pw_w @ dw_b + pw_b)
    fused_b = (pw_w2.astype(jnp.float32) @ dw_b.reshape(c_in, 1).astype(jnp.float32)
               + pw_b.reshape(c_out, 1).astype(jnp.float32))           # (C_out, 1) f32

    # --- hardware-aware block sizing over the batch axis ---
    vmem_cap = _vmem_capacity_bytes()
    vmem_target = vmem_cap // 4          # working-set target, leaves pipelining headroom
    itemsize = jnp.dtype(x.dtype).itemsize
    per_b = (2 * c_in * length * itemsize       # x double buffer
             + 2 * c_out * length * itemsize    # out double buffer
             + 4 * c_in * length * 4)           # f32 temporaries (x, rolled, masked, acc)
    b_blk = max(1, min(n, vmem_target // max(per_b, 1), 8))
    # Keep >= 2 (ideally >= 4) grid steps so both v7x TensorCores get work and
    # input/output DMA actually pipelines against compute.
    if n >= 4:
        b_blk = min(b_blk, pl.cdiv(n, 4))
    elif n >= 2:
        b_blk = min(b_blk, pl.cdiv(n, 2))
    grid = pl.cdiv(n, b_blk)

    # bf16 MXU operands (f32 accumulation) when inputs are 16-bit; exact f32
    # operands otherwise.
    mxu_dtype = jnp.bfloat16 if itemsize <= 2 else jnp.float32

    vmem_limit = int(min(3 * vmem_cap // 4, 96 * 1024 * 1024))

    kernel = functools.partial(_dsconv_kernel, k=k, mxu_dtype=mxu_dtype)

    out = pl.pallas_call(
        kernel,
        out_shape=jax.ShapeDtypeStruct((n, c_out, length), x.dtype),
        grid_spec=pltpu.PrefetchScalarGridSpec(
            num_scalar_prefetch=0,
            grid=(grid,),
            in_specs=[
                pl.BlockSpec((b_blk, c_in, length), lambda i: (i, 0, 0)),   # x
                pl.BlockSpec((k, c_in, 1), lambda i: (0, 0, 0)),            # dw taps
                pl.BlockSpec((c_out, c_in), lambda i: (0, 0)),              # pw weight
                pl.BlockSpec((c_out, 1), lambda i: (0, 0)),                 # fused bias
            ],
            out_specs=pl.BlockSpec((b_blk, c_out, length), lambda i: (i, 0, 0)),
        ),
        compiler_params=pltpu.CompilerParams(
            dimension_semantics=("parallel",),
            vmem_limit_bytes=vmem_limit,
        ),
    )(x, dw_wk, pw_w2, fused_b)

    return out


def _reference(x, dw_w, dw_b, pw_w, pw_b, *, k: int):
    """Pure-JAX reference matching nn.Conv1d(groups=C_in) -> nn.Conv1d(1x1)."""
    c_in = x.shape[1]
    pad = k // 2
    dn = lax.conv_dimension_numbers(x.shape, dw_w.shape, ("NCH", "OIH", "NCH"))
    y = lax.conv_general_dilated(x, dw_w, window_strides=(1,),
                                 padding=[(pad, pad)],
                                 dimension_numbers=dn,
                                 feature_group_count=c_in)
    y = y + dw_b[None, :, None]
    dn2 = lax.conv_dimension_numbers(y.shape, pw_w.shape, ("NCH", "OIH", "NCH"))
    z = lax.conv_general_dilated(y, pw_w, window_strides=(1,),
                                 padding=[(0, 0)],
                                 dimension_numbers=dn2)
    return z + pw_b[None, :, None]


if __name__ == "__main__":
    # Small shapes consistent with Conv1d forward: x is (N, in_ch, L).
    N, IN_CH, OUT_CH, L, K = 4, 8, 16, 128, 5

    key = jax.random.PRNGKey(0)
    kx, kdw, kpw, kb1, kb2 = jax.random.split(key, 5)

    x = jax.random.normal(kx, (N, IN_CH, L), dtype=jnp.float32)

    fan_in_dw = 1 * K  # groups=in_ch -> each depthwise filter sees 1 input channel
    dw_w = jax.random.normal(kdw, (IN_CH, 1, K), dtype=jnp.float32) * jnp.sqrt(2.0 / fan_in_dw)
    pw_w = jax.random.normal(kpw, (OUT_CH, IN_CH, 1), dtype=jnp.float32) * jnp.sqrt(2.0 / IN_CH)
    # Non-zero biases to exercise the full forward semantics (module inits them
    # to zero, but forward() must handle arbitrary trained values).
    dw_b = jax.random.normal(kb1, (IN_CH,), dtype=jnp.float32) * 0.1
    pw_b = jax.random.normal(kb2, (OUT_CH,), dtype=jnp.float32) * 0.1

    # --- f32 path: exact check against the conv reference ---
    out = depthwise_separable_conv(x, dw_w, dw_b, pw_w, pw_b, k=K)
    out = jax.block_until_ready(out)
    ref = jax.block_until_ready(_reference(x, dw_w, dw_b, pw_w, pw_b, k=K))
    np.testing.assert_allclose(np.asarray(out), np.asarray(ref),
                               rtol=1e-5, atol=1e-5)

    # --- bf16 path: native-dtype I/O (half HBM traffic), bf16 MXU operands ---
    x_bf = x.astype(jnp.bfloat16)
    dw_w_bf = dw_w.astype(jnp.bfloat16)
    pw_w_bf = pw_w.astype(jnp.bfloat16)
    out_bf = depthwise_separable_conv(x_bf, dw_w_bf, dw_b, pw_w_bf, pw_b, k=K)
    out_bf = jax.block_until_ready(out_bf)
    ref_bf = _reference(x_bf.astype(jnp.float32), dw_w_bf.astype(jnp.float32),
                        dw_b, pw_w_bf.astype(jnp.float32), pw_b, k=K)
    np.testing.assert_allclose(np.asarray(out_bf, dtype=np.float32),
                               np.asarray(ref_bf), rtol=1e-1, atol=2e-1)

    print("KERNEL_OK")
</pallas_src>

<mosaic_0001>
module attributes {stable_mosaic.version = 11 : i64} {
  func.func @_dsconv_kernel(%arg0: i32, %arg1: memref<1x8x128xf32, #tpu.memory_space<vmem>>, %arg2: memref<5x8x1xf32, #tpu.memory_space<vmem>>, %arg3: memref<16x8xf32, #tpu.memory_space<vmem>>, %arg4: memref<16x1xf32, #tpu.memory_space<vmem>>, %arg5: memref<1x16x128xf32, #tpu.memory_space<vmem>>) attributes {dimension_semantics = [#tpu.dimension_semantics<parallel>], iteration_bounds = array<i64: 4>, scalar_prefetch = 0 : i64, scratch_operands = 0 : i64, tpu.core_type = #tpu.core_type<tc>, window_params = [{transform_indices = @transform_0, window_bounds = array<i64: 1, 8, 128>}, {pipeline_mode = #tpu.pipeline_mode<synchronous>, transform_indices = @transform_1, window_bounds = array<i64: 5, 8, 1>}, {pipeline_mode = #tpu.pipeline_mode<synchronous>, transform_indices = @transform_2, window_bounds = array<i64: 16, 8>}, {pipeline_mode = #tpu.pipeline_mode<synchronous>, transform_indices = @transform_3, window_bounds = array<i64: 16, 1>}, {transform_indices = @transform_4, window_bounds = array<i64: 1, 16, 128>}]} {
    %0 = tpu.iota {dimensions = array<i32: 1>} : vector<1x128xi32>
    %c0 = arith.constant 0 : index
    %c0_0 = arith.constant 0 : index
    %c0_1 = arith.constant 0 : index
    %1 = vector.load %arg2[%c0, %c0_0, %c0_1] : memref<5x8x1xf32, #tpu.memory_space<vmem>>, vector<1x8x1xf32>
    %2 = vector.shape_cast %1 : vector<1x8x1xf32> to vector<8x1xf32>
    %c1 = arith.constant 1 : index
    %c0_2 = arith.constant 0 : index
    %c0_3 = arith.constant 0 : index
    %3 = vector.load %arg2[%c1, %c0_2, %c0_3] : memref<5x8x1xf32, #tpu.memory_space<vmem>>, vector<1x8x1xf32>
    %4 = vector.shape_cast %3 : vector<1x8x1xf32> to vector<8x1xf32>
    %c2 = arith.constant 2 : index
    %c0_4 = arith.constant 0 : index
    %c0_5 = arith.constant 0 : index
    %5 = vector.load %arg2[%c2, %c0_4, %c0_5] : memref<5x8x1xf32, #tpu.memory_space<vmem>>, vector<1x8x1xf32>
    %6 = vector.shape_cast %5 : vector<1x8x1xf32> to vector<8x1xf32>
    %c3 = arith.constant 3 : index
    %c0_6 = arith.constant 0 : index
    %c0_7 = arith.constant 0 : index
    %7 = vector.load %arg2[%c3, %c0_6, %c0_7] : memref<5x8x1xf32, #tpu.memory_space<vmem>>, vector<1x8x1xf32>
    %8 = vector.shape_cast %7 : vector<1x8x1xf32> to vector<8x1xf32>
    %c4 = arith.constant 4 : index
    %c0_8 = arith.constant 0 : index
    %c0_9 = arith.constant 0 : index
    %9 = vector.load %arg2[%c4, %c0_8, %c0_9] : memref<5x8x1xf32, #tpu.memory_space<vmem>>, vector<1x8x1xf32>
    %10 = vector.shape_cast %9 : vector<1x8x1xf32> to vector<8x1xf32>
    %c0_10 = arith.constant 0 : index
    %c0_11 = arith.constant 0 : index
    %11 = vector.load %arg3[%c0_10, %c0_11] : memref<16x8xf32, #tpu.memory_space<vmem>>, vector<16x8xf32>
    %c0_12 = arith.constant 0 : index
    %c0_13 = arith.constant 0 : index
    %12 = vector.load %arg4[%c0_12, %c0_13] : memref<16x1xf32, #tpu.memory_space<vmem>>, vector<16x1xf32>
    %c0_14 = arith.constant 0 : index
    %c0_15 = arith.constant 0 : index
    %c0_16 = arith.constant 0 : index
    %13 = vector.load %arg1[%c0_14, %c0_15, %c0_16] : memref<1x8x128xf32, #tpu.memory_space<vmem>>, vector<1x8x128xf32>
    %14 = vector.shape_cast %13 : vector<1x8x128xf32> to vector<8x128xf32>
    %15 = vector.broadcast %6 : vector<8x1xf32> to vector<8x128xf32>
    %16 = arith.mulf %15, %14 : vector<8x128xf32>
    %c2_i32 = arith.constant 2 : i32
    %17 = tpu.dynamic_rotate %14 by %c2_i32 dim 1 : vector<8x128xf32>, i32 -> vector<8x128xf32>
    %c2_i32_17 = arith.constant 2 : i32
    %18 = vector.broadcast %c2_i32_17 : i32 to vector<1x128xi32>
    %19 = arith.cmpi sge, %0, %18 : vector<1x128xi32>
    %cst = arith.constant 0.000000e+00 : f32
    %20 = vector.shape_cast %19 : vector<1x128xi1> to vector<1x128xi1>
    %21 = vector.broadcast %20 : vector<1x128xi1> to vector<8x128xi1>
    %22 = vector.broadcast %cst : f32 to vector<8x128xf32>
    %23 = arith.select %21, %17, %22 : vector<8x128xi1>, vector<8x128xf32>
    %24 = vector.broadcast %2 : vector<8x1xf32> to vector<8x128xf32>
    %25 = arith.mulf %24, %23 : vector<8x128xf32>
    %26 = arith.addf %16, %25 : vector<8x128xf32>
    %c1_i32 = arith.constant 1 : i32
    %27 = tpu.dynamic_rotate %14 by %c1_i32 dim 1 : vector<8x128xf32>, i32 -> vector<8x128xf32>
    %c1_i32_18 = arith.constant 1 : i32
    %28 = vector.broadcast %c1_i32_18 : i32 to vector<1x128xi32>
    %29 = arith.cmpi sge, %0, %28 : vector<1x128xi32>
    %cst_19 = arith.constant 0.000000e+00 : f32
    %30 = vector.shape_cast %29 : vector<1x128xi1> to vector<1x128xi1>
    %31 = vector.broadcast %30 : vector<1x128xi1> to vector<8x128xi1>
    %32 = vector.broadcast %cst_19 : f32 to vector<8x128xf32>
    %33 = arith.select %31, %27, %32 : vector<8x128xi1>, vector<8x128xf32>
    %34 = vector.broadcast %4 : vector<8x1xf32> to vector<8x128xf32>
    %35 = arith.mulf %34, %33 : vector<8x128xf32>
    %36 = arith.addf %26, %35 : vector<8x128xf32>
    %c127_i32 = arith.constant 127 : i32
    %37 = tpu.dynamic_rotate %14 by %c127_i32 dim 1 : vector<8x128xf32>, i32 -> vector<8x128xf32>
    %c127_i32_20 = arith.constant 127 : i32
    %38 = vector.broadcast %c127_i32_20 : i32 to vector<1x128xi32>
    %39 = arith.cmpi slt, %0, %38 : vector<1x128xi32>
    %cst_21 = arith.constant 0.000000e+00 : f32
    %40 = vector.shape_cast %39 : vector<1x128xi1> to vector<1x128xi1>
    %41 = vector.broadcast %40 : vector<1x128xi1> to vector<8x128xi1>
    %42 = vector.broadcast %cst_21 : f32 to vector<8x128xf32>
    %43 = arith.select %41, %37, %42 : vector<8x128xi1>, vector<8x128xf32>
    %44 = vector.broadcast %8 : vector<8x1xf32> to vector<8x128xf32>
    %45 = arith.mulf %44, %43 : vector<8x128xf32>
    %46 = arith.addf %36, %45 : vector<8x128xf32>
    %c126_i32 = arith.constant 126 : i32
    %47 = tpu.dynamic_rotate %14 by %c126_i32 dim 1 : vector<8x128xf32>, i32 -> vector<8x128xf32>
    %c126_i32_22 = arith.constant 126 : i32
    %48 = vector.broadcast %c126_i32_22 : i32 to vector<1x128xi32>
    %49 = arith.cmpi slt, %0, %48 : vector<1x128xi32>
    %cst_23 = arith.constant 0.000000e+00 : f32
    %50 = vector.shape_cast %49 : vector<1x128xi1> to vector<1x128xi1>
    %51 = vector.broadcast %50 : vector<1x128xi1> to vector<8x128xi1>
    %52 = vector.broadcast %cst_23 : f32 to vector<8x128xf32>
    %53 = arith.select %51, %47, %52 : vector<8x128xi1>, vector<8x128xf32>
    %54 = vector.broadcast %10 : vector<8x1xf32> to vector<8x128xf32>
    %55 = arith.mulf %54, %53 : vector<8x128xf32>
    %56 = arith.addf %46, %55 : vector<8x128xf32>
    %cst_24 = arith.constant dense<0.000000e+00> : vector<16x128xf32>
    %57 = tpu.matmul %11, %56, %cst_24 {dimension_numbers = #tpu.dot_dimension_numbers<[1], [0], [0], [1], [0, 0, 1, 1], [], []>} : vector<16x8xf32>, vector<8x128xf32>, vector<16x128xf32> -> vector<16x128xf32>
    %58 = vector.broadcast %12 : vector<16x1xf32> to vector<16x128xf32>
    %59 = arith.addf %57, %58 : vector<16x128xf32>
    %c0_25 = arith.constant 0 : index
    %c0_26 = arith.constant 0 : index
    %c0_27 = arith.constant 0 : index
    %60 = vector.load %arg5[%c0_25, %c0_26, %c0_27] : memref<1x16x128xf32, #tpu.memory_space<vmem>>, vector<1x16x128xf32>
    %61 = vector.shape_cast %60 : vector<1x16x128xf32> to vector<16x128xf32>
    %62 = vector.shape_cast %59 : vector<16x128xf32> to vector<1x16x128xf32>
    tpu.vector_store %arg5[%c0_25, %c0_26, %c0_27], %62 {strides = array<i32>} : memref<1x16x128xf32, #tpu.memory_space<vmem>>, vector<1x16x128xf32>,
    return
  }
  func.func @transform_0(%arg0: i32) -> (i32, i32, i32) {
    %c0_i32 = arith.constant 0 : i32
    %c0_i32_0 = arith.constant 0 : i32
    %c0_i32_1 = arith.constant 0 : i32
    return %arg0, %c0_i32, %c0_i32_0 : i32, i32, i32
  }
  func.func @transform_1(%arg0: i32) -> (i32, i32, i32) {
    %c0_i32 = arith.constant 0 : i32
    %c0_i32_0 = arith.constant 0 : i32
    %c0_i32_1 = arith.constant 0 : i32
    %c0_i32_2 = arith.constant 0 : i32
    return %c0_i32, %c0_i32_0, %c0_i32_1 : i32, i32, i32
  }
  func.func @transform_2(%arg0: i32) -> (i32, i32) {
    %c0_i32 = arith.constant 0 : i32
    %c0_i32_0 = arith.constant 0 : i32
    %c0_i32_1 = arith.constant 0 : i32
    return %c0_i32, %c0_i32_0 : i32, i32
  }
  func.func @transform_3(%arg0: i32) -> (i32, i32) {
    %c0_i32 = arith.constant 0 : i32
    %c0_i32_0 = arith.constant 0 : i32
    %c0_i32_1 = arith.constant 0 : i32
    return %c0_i32, %c0_i32_0 : i32, i32
  }
  func.func @transform_4(%arg0: i32) -> (i32, i32, i32) {
    %c0_i32 = arith.constant 0 : i32
    %c0_i32_0 = arith.constant 0 : i32
    %c0_i32_1 = arith.constant 0 : i32
    return %arg0, %c0_i32, %c0_i32_0 : i32, i32, i32
  }
}

</mosaic_0001>

<llo_original>
// kernel: tpu_custom_call.1
$region0: #{tpu_custom_call.1}
  #allocation0 [shape = 'u32[]', space=smem, size = 0x4, offset = 0x4, fixed_abs, tag = 'smem constant byte address 0x4 - core index']
  #allocation1 [shape = 'u32[72,128]{1,0:T(1,128)}', space=vmem, size = 0x9000, scoped, tag = 'internal scratch']
  %s0 = inlined_call_operand.vmem [shape: f32[4,8,128], index: 0, kind: input, shape index: {}]
  %s1 = inlined_call_operand.vmem [shape: f32[5,8,1], index: 1, kind: input, shape index: {}]
  %s2 = inlined_call_operand.vmem [shape: f32[16,8], index: 2, kind: input, shape index: {}]
  %s3 = inlined_call_operand.vmem [shape: f32[16,1], index: 3, kind: input, shape index: {}]
  %s4 = inlined_call_operand.hbm [shape: f32[4,16,128], index: 4, kind: output, shape index: {}]
  %s5 = sld [smem:[#allocation0]]
  $region49: #{tpu_custom_call.1} parent=0
    _
  %s7 = ssub.s32 1, %s5
  %s8 = scalar_select 0, %s7, %s5
  $region1: #{tpu_custom_call.1} parent=0
    #allocation2 [shape = 'u8[16384]{0}', space=vmem, size = 0x4000, scoped, tag = 'output window, operand 0']
    #allocation3 [shape = 's32[2]{0}', space=sflag, size = 0x8, scoped, tag = 'scoped memory for tpu_custom_call.1']
    %9 = vsyncpa [#allocation3], 0
    %s10 = scalar_lea.sflag [#allocation3], 1
    %11 = vsyncpa %s10, 0
    loop: start=0, step=1, limit=6
    $region2: #{tpu_custom_call.1} parent=1 // loop_pre_header
      _
    $region3: #{tpu_custom_call.1} parent=1 // loop_header
      %s13 = sphi 0, %s17
      %p14 = scmp.ge.s32.totalorder %s13, 6
      %s23 = sphi 0, %s25
      %s26 = sphi 0, %s23
      %s27 = sphi 0, %s26
      %s43 = sphi 0, %s27
      %s47 = sphi 0, %s47
      %s49 = sphi 0, %s47
      %s50 = sphi 0, %s49
      %s64 = sphi 0, %s50
      %s68 = sphi 0, %s68
      %s70 = sphi 0, %s68
      %s71 = sphi 0, %s70
      %s85 = sphi 0, %s71
      %s89 = sphi 0, %s89
      %s91 = sphi 0, %s89
      %s92 = sphi 0, %s91
      %s106 = sphi 0, %s92
      %s112 = sphi 0, %s114
      %s115 = sphi 0, %s112
      %s116 = sphi 0, %s115
      %s132 = sphi 0, %s116
    $region4: #{tpu_custom_call.1} parent=1 // loop_header_branch
      %16 = sbr.rel (%p14) target = $region8
    $region5: #{tpu_custom_call.1} parent=1 // loop_body
      %s18 = ssub.s32 %s13, 1
      %s19 = ssub.s32 %s13, 2
      %s20 = sadd.s32 %s13, 1
      %s21 = ssub.s32 %s13, %s20
      %p22 = scmp.eq.s32.totalorder %s21, 0
      %s24 = sadd.s32 %s23, 1
      %s25 = scalar_select %p22, %s23, %s24
      %p28 = pneg %p22
      %p29 = scmp.eq.s32.totalorder %s13, 3
      %p30 = por %p28, %p29
      %p31 = scmp.ne.s32.totalorder %s23, %s26
      %p32 = scmp.eq.s32.totalorder %s13, 0
      %p33 = por %p31, %p32
      %p34 = scmp.ne.s32.totalorder %s23, %s26
      %p35 = scmp.eq.s32.totalorder %s18, 3
      %p36 = por %p34, %p35
      %p37 = scmp.ne.s32.totalorder %s26, %s27
      %p38 = scmp.eq.s32.totalorder %s18, 0
      %p39 = por %p37, %p38
      %p40 = scmp.ne.s32.totalorder %s26, %s27
      %p41 = scmp.eq.s32.totalorder %s19, 3
      %p42 = por %p40, %p41
      %p44 = scmp.ne.s32.totalorder %s27, %s43
      %p45 = scmp.eq.s32.totalorder %s19, 0
      %p46 = por %p44, %p45
      %s48 = sadd.s32 %s47, 1
      %p51 = scmp.eq.s32.totalorder %s13, 3
      %p52 = scmp.ne.s32.totalorder %s47, %s49
      %p53 = scmp.eq.s32.totalorder %s13, 0
      %p54 = por %p52, %p53
      %p55 = scmp.ne.s32.totalorder %s47, %s49
      %p56 = scmp.eq.s32.totalorder %s18, 3
      %p57 = por %p55, %p56
      %p58 = scmp.ne.s32.totalorder %s49, %s50
      %p59 = scmp.eq.s32.totalorder %s18, 0
      %p60 = por %p58, %p59
      %p61 = scmp.ne.s32.totalorder %s49, %s50
      %p62 = scmp.eq.s32.totalorder %s19, 3
      %p63 = por %p61, %p62
      %p65 = scmp.ne.s32.totalorder %s50, %s64
      %p66 = scmp.eq.s32.totalorder %s19, 0
      %p67 = por %p65, %p66
      %s69 = sadd.s32 %s68, 1
      %p72 = scmp.eq.s32.totalorder %s13, 3
      %p73 = scmp.ne.s32.totalorder %s68, %s70
      %p74 = scmp.eq.s32.totalorder %s13, 0
      %p75 = por %p73, %p74
      %p76 = scmp.ne.s32.totalorder %s68, %s70
      %p77 = scmp.eq.s32.totalorder %s18, 3
      %p78 = por %p76, %p77
      %p79 = scmp.ne.s32.totalorder %s70, %s71
      %p80 = scmp.eq.s32.totalorder %s18, 0
      %p81 = por %p79, %p80
      %p82 = scmp.ne.s32.totalorder %s70, %s71
      %p83 = scmp.eq.s32.totalorder %s19, 3
      %p84 = por %p82, %p83
      %p86 = scmp.ne.s32.totalorder %s71, %s85
      %p87 = scmp.eq.s32.totalorder %s19, 0
      %p88 = por %p86, %p87
      %s90 = sadd.s32 %s89, 1
      %p93 = scmp.eq.s32.totalorder %s13, 3
      %p94 = scmp.ne.s32.totalorder %s89, %s91
      %p95 = scmp.eq.s32.totalorder %s13, 0
      %p96 = por %p94, %p95
      %p97 = scmp.ne.s32.totalorder %s89, %s91
      %p98 = scmp.eq.s32.totalorder %s18, 3
      %p99 = por %p97, %p98
      %p100 = scmp.ne.s32.totalorder %s91, %s92
      %p101 = scmp.eq.s32.totalorder %s18, 0
      %p102 = por %p100, %p101
      %p103 = scmp.ne.s32.totalorder %s91, %s92
      %p104 = scmp.eq.s32.totalorder %s19, 3
      %p105 = por %p103, %p104
      %p107 = scmp.ne.s32.totalorder %s92, %s106
      %p108 = scmp.eq.s32.totalorder %s19, 0
      %p109 = por %p107, %p108
      %s110 = ssub.s32 %s13, %s20
      %p111 = scmp.eq.s32.totalorder %s110, 0
      %s113 = sadd.s32 %s112, 1
      %s114 = scalar_select %p111, %s112, %s113
      %p117 = pneg %p111
      %p118 = scmp.eq.s32.totalorder %s13, 3
      %p119 = por %p117, %p118
      %p120 = scmp.ne.s32.totalorder %s112, %s115
      %p121 = scmp.eq.s32.totalorder %s13, 0
      %p122 = por %p120, %p121
      %p123 = scmp.ne.s32.totalorder %s112, %s115
      %p124 = scmp.eq.s32.totalorder %s18, 3
      %p125 = por %p123, %p124
      %p126 = scmp.ne.s32.totalorder %s115, %s116
      %p127 = scmp.eq.s32.totalorder %s18, 0
      %p128 = por %p126, %p127
      %p129 = scmp.ne.s32.totalorder %s115, %s116
      %p130 = scmp.eq.s32.totalorder %s19, 3
      %p131 = por %p129, %p130
      %p133 = scmp.ne.s32.totalorder %s116, %s132
      %p134 = scmp.eq.s32.totalorder %s19, 0
      %p135 = por %p133, %p134
      %p136 = scmp.le.s32.totalorder 1, %s13
      %p137 = scmp.lt.s32.totalorder %s13, 5
      %p138 = pnand %p136, %p137
      %p139 = pneg %p138
      // Predicated region
      $region9: #{tpu_custom_call.1} parent=5 // pred_check
        _
      $region10: #{tpu_custom_call.1} parent=5 // pred_check_branch
        %141 = sbr.rel (%p138) target = $region12
      $region11: #{tpu_custom_call.1} parent=5 // pred_region
        %s142 = ssub.s32 %s13, 1
        // Predicated region
        $region13: #{tpu_custom_call.1} parent=11 // pred_check
          %p143 = pneg %p60
        $region14: #{tpu_custom_call.1} parent=11 // pred_check_branch
          %145 = sbr.rel (%p143) target = $region16
        $region15: #{tpu_custom_call.1} parent=11 // pred_region
          _
        $region16: #{tpu_custom_call.1} parent=11 // pred_fallthru
          _
        // Predicated region
        $region17: #{tpu_custom_call.1} parent=11 // pred_check
          %p146 = pneg %p81
        $region18: #{tpu_custom_call.1} parent=11 // pred_check_branch
          %148 = sbr.rel (%p146) target = $region20
        $region19: #{tpu_custom_call.1} parent=11 // pred_region
          _
        $region20: #{tpu_custom_call.1} parent=11 // pred_fallthru
          _
        // Predicated region
        $region21: #{tpu_custom_call.1} parent=11 // pred_check
          %p149 = pneg %p102
        $region22: #{tpu_custom_call.1} parent=11 // pred_check_branch
          %151 = sbr.rel (%p149) target = $region24
        $region23: #{tpu_custom_call.1} parent=11 // pred_region
          _
        $region24: #{tpu_custom_call.1} parent=11 // pred_fallthru
          _
      $region12: #{tpu_custom_call.1} parent=5 // pred_fallthru
        _
      %p152 = scmp.lt.s32.totalorder %s13, 4
      // Predicated region
      $region25: #{tpu_custom_call.1} parent=5 // pred_check
        %p153 = pneg %p152
      $region26: #{tpu_custom_call.1} parent=5 // pred_check_branch
        %155 = sbr.rel (%p153) target = $region28
      $region27: #{tpu_custom_call.1} parent=5 // pred_region
        // Predicated region
        $region29: #{tpu_custom_call.1} parent=27 // pred_check
          %p156 = pneg %p33
        $region30: #{tpu_custom_call.1} parent=27 // pred_check_branch
          %158 = sbr.rel (%p156) target = $region32
        $region31: #{tpu_custom_call.1} parent=27 // pred_region
          %p159 = scmp.lt.s32.totalorder %s13, 3
          %s160 = scalar_select %p159, %s13, 3
          %s161 = smul.addr %s160, 8
          %s162 = scalar_lea.vmem %s0, %s161
        $region32: #{tpu_custom_call.1} parent=27 // pred_fallthru
          _
      $region28: #{tpu_custom_call.1} parent=5 // pred_fallthru
        _
      %p163 = scmp.le.s32.totalorder 1, %s13
      %p164 = scmp.lt.s32.totalorder %s13, 5
      %p165 = pnand %p163, %p164
      %p166 = pneg %p165
      // Predicated region
      $region33: #{tpu_custom_call.1} parent=5 // pred_check
        _
      $region34: #{tpu_custom_call.1} parent=5 // pred_check_branch
        %168 = sbr.rel (%p165) target = $region36
      $region35: #{tpu_custom_call.1} parent=5 // pred_region
        %s169 = ssub.s32 %s13, 1
        %p170 = scmp.lt.s32.totalorder %s18, 3
        %s171 = scalar_select %p170, %s18, 3
        %s172 = smul.addr %s171, 8
        %s173 = scalar_lea.vmem %s0, %s172
        %p174 = pneg %p39
        %p175 = pneg %p36
        %p176 = pneg %p60
        %p177 = pneg %p57
        %p178 = pneg %p81
        %p179 = pneg %p78
        %p180 = pneg %p102
        %p181 = pneg %p99
        %p182 = pneg %p128
        %p183 = pneg %p125
        %s184 = sand.u32 %s115, 1
        %s185 = scalar_lea.sflag [#allocation3], %s184
        %s186 = sand.u32 %s115, 1
        %s187 = smul.addr %s186, 16
        %s188 = scalar_lea.vmem [#allocation2], %s187
        %p189 = scmp.lt.s32.totalorder %s18, 3
        %s190 = scalar_select %p189, %s18, 3
        %s191 = smul.addr %s190, 8
        %s192 = scalar_lea.vmem %s0, %s191
        %v193 = vlaneseq
        %v194 = vand.u32 %v193, 127
        %v195 = vld [vmem:[%s1] sm:$0xff]
        %s196 = scalar_lea.vmem %s1, 8
        %v197 = vld [vmem:[%s196] sm:$0xff]
        %s198 = scalar_lea.vmem %s1, 16
        %v199 = vld [vmem:[%s198] sm:$0xff]
        %s200 = scalar_lea.vmem %s1, 24
        %v201 = vld [vmem:[%s200] sm:$0xff]
        %s202 = scalar_lea.vmem %s1, 32
        %v203 = vld [vmem:[%s202] sm:$0xff]
        %v204 = vld [vmem:[%s2] sm:$0xff]
        %v205 = vld [vmem:[%s2 + $0x8] sm:$0xff]
        %v206 = vld [vmem:[%s3] sm:$0xff]
        %v207 = vld [vmem:[%s3 + $0x8] sm:$0xff]
        %v208 = vld [vmem:[%s192] sm:$0xff]
        %210 = vset.pattern.permute.xlu0 0
        %211 = vperm.xlu0 %210, %v199
        %v212 = vpop.permute.xlu0 %211
        %v214 = vmul.f32 %v212, %v208
        %215 = vrot.lane.b32.xlu0 %v208, 2
        %v216 = vpop.permute.xlu0 %215
        %vm217 = vcmp.ge.s32.totalorder %v194, 2
        %v218 = vsel %vm217, 1, 0
        %vm219 = vcmp.eq.s32.totalorder %v218, 1
        %v220 = vsel %vm219, %v216, 0.0
        %222 = vset.pattern.permute.xlu0 0
        %223 = vperm.xlu0 %222, %v195
        %v224 = vpop.permute.xlu0 %223
        %v226 = vmul.f32 %v224, %v220
        %v227 = vadd.f32 %v214, %v226
        %228 = vrot.lane.b32.xlu0 %v208, 1
        %v229 = vpop.permute.xlu0 %228
        %vm230 = vcmp.ge.s32.totalorder %v194, 1
        %v231 = vsel %vm230, 1, 0
        %vm232 = vcmp.eq.s32.totalorder %v231, 1
        %v233 = vsel %vm232, %v229, 0.0
        %235 = vset.pattern.permute.xlu0 0
        %236 = vperm.xlu0 %235, %v197
        %v237 = vpop.permute.xlu0 %236
        %v239 = vmul.f32 %v237, %v233
        %v240 = vadd.f32 %v227, %v239
        %241 = vrot.lane.b32.xlu0 %v208, 127
        %v242 = vpop.permute.xlu0 %241
        %vm243 = vcmp.lt.s32.totalorder %v194, 127
        %v244 = vsel %vm243, 1, 0
        %vm245 = vcmp.eq.s32.totalorder %v244, 1
        %v246 = vsel %vm245, %v242, 0.0
        %248 = vset.pattern.permute.xlu0 0
        %249 = vperm.xlu0 %248, %v201
        %v250 = vpop.permute.xlu0 %249
        %v252 = vmul.f32 %v250, %v246
        %v253 = vadd.f32 %v240, %v252
        %254 = vrot.lane.b32.xlu0 %v208, 126
        %v255 = vpop.permute.xlu0 %254
        %vm256 = vcmp.lt.s32.totalorder %v194, 126
        %v257 = vsel %vm256, 1, 0
        %vm258 = vcmp.eq.s32.totalorder %v257, 1
        %v259 = vsel %vm258, %v255, 0.0
        %261 = vset.pattern.permute.xlu0 0
        %262 = vperm.xlu0 %261, %v203
        %v263 = vpop.permute.xlu0 %262
        %v265 = vmul.f32 %v263, %v259
        %v266 = vadd.f32 %v253, %v265
        %268 = vset.pattern.permute.xlu0 0
        %269 = vperm.xlu0 %268, %v206
        %v270 = vpop.permute.xlu0 %269
        %273 = vset.pattern.permute.xlu0 0
        %274 = vperm.xlu0 %273, %v207
        %v275 = vpop.permute.xlu0 %274
        %vm277 = vcmask 64512
        %v279 = vsel %vm277, %v204, 0
        %v282 = vsel %vm277, %v205, 0
        %284 = vmatpush.msra.mxu0 0.0
        %285 = vmatpush.msra.mxu0 0.0
        %286 = vmatpush.msra.mxu0 0.0
        %287 = vmatpush.msra.mxu0 0.0
        %288 = vmatpush.msra.mxu0 0.0
        %289 = vmatpush.msra.mxu0 0.0
        %290 = vmatpush.msra.mxu0 0.0
        %291 = vmatpush.msra.mxu0 0.0
        %292 = vmatpush.msra.mxu0 0.0
        %293 = vmatpush.msra.mxu0 0.0
        %294 = vmatpush.msra.mxu0 0.0
        %295 = vmatpush.msra.mxu0 0.0
        %296 = vmatpush.msra.mxu0 0.0
        %297 = vmatpush.msra.mxu0 0.0
        %298 = vmatpush.msra.mxu0 0.0
        %299 = vmatpush.msra.mxu0 %v266
        %300 = vmatmul.f32.gmra.mxu0 %v279
        %v301 = vpop.f32.mrf.mxu0
        %v302 = vadd.f32 %v270, %v301
        %303 = vmatmul.f32.gmra.mxu0 %v282
        %v304 = vpop.f32.mrf.mxu0
        %v305 = vadd.f32 %v275, %v304
        %306 = vdwg.mxu0
        %307 = vst [vmem:[%s188] sm:$0xff] %v302
        %308 = vst [vmem:[%s188 + $0x8] sm:$0xff] %v305
        %s309 = sand.u32 %s115, 1
        %s310 = scalar_lea.sflag [#allocation3], %s309
        %s311 = sand.u32 %s115, 1
        %s312 = smul.addr %s311, 16
        %s313 = scalar_lea.vmem [#allocation2], %s312
        // Predicated region
        $region37: #{tpu_custom_call.1} parent=35 // pred_check
          %p314 = pneg %p125
        $region38: #{tpu_custom_call.1} parent=35 // pred_check_branch
          %316 = sbr.rel (%p314) target = $region40
        $region39: #{tpu_custom_call.1} parent=35 // pred_region
          %318 = vsyncadd %s310, 0
          %s319 = smul.addr %s18, 2
          %s320 = smul.addr %s319, 8
          %s321 = scalar_lea.hbm %s4, %s320
          %s322 = sshll.u32 %s313, 4
          %s323 = int_to_ptr.vmem [resolvable:$true] %s322
          %s324 = sshll.u32 %s321, 4
          %s325 = int_to_ptr.hbm [resolvable:$true] %s324
          %330 = dma.vmem_to_hbm [thread:$0]  %s323, 256, %s325, %s310, 128, 128, 8
        $region40: #{tpu_custom_call.1} parent=35 // pred_fallthru
          _
      $region36: #{tpu_custom_call.1} parent=5 // pred_fallthru
        _
      %p331 = scmp.le.s32.totalorder 2, %s13
      // Predicated region
      $region41: #{tpu_custom_call.1} parent=5 // pred_check
        %p332 = pneg %p331
      $region42: #{tpu_custom_call.1} parent=5 // pred_check_branch
        %334 = sbr.rel (%p332) target = $region44
      $region43: #{tpu_custom_call.1} parent=5 // pred_region
        %s335 = ssub.s32 %s13, 2
        // Predicated region
        $region45: #{tpu_custom_call.1} parent=43 // pred_check
          %p336 = pneg %p131
        $region46: #{tpu_custom_call.1} parent=43 // pred_check_branch
          %338 = sbr.rel (%p336) target = $region48
        $region47: #{tpu_custom_call.1} parent=43 // pred_region
          %s339 = sand.u32 %s116, 1
          %s340 = scalar_lea.sflag [#allocation3], %s339
          %s341 = sand.u32 %s116, 1
          %s342 = smul.addr %s341, 16
          %s343 = scalar_lea.vmem [#allocation2], %s342
          %345 = dma.done %s340, 256
        $region48: #{tpu_custom_call.1} parent=43 // pred_fallthru
          _
      $region44: #{tpu_custom_call.1} parent=5 // pred_fallthru
        _
    $region6: #{tpu_custom_call.1} parent=1 // loop_footer
      %s17 = sadd.s32 1, %s13
    $region7: #{tpu_custom_call.1} parent=1 // loop_footer_branch
      %12 = sbr.rel target = $region3
    $region8: #{tpu_custom_call.1} parent=1 // loop_exit
      _
    %346 = vsyncpa [#allocation3], 1
    %s347 = scalar_lea.sflag [#allocation3], 1
    %348 = vsyncpa %s347, 1

</llo_original>
